<compile_context>
chip_gen: v5e
topology: v5e:2x2
jax: 0.10.0
libtpu: 0.0.40
codegen_flags: <defaults>
</compile_context>

<pallas_src>
import functools

import jax
import jax.numpy as jnp
from jax.experimental import pallas as pl
from jax.experimental.pallas import tpu as pltpu


def _se_kernel(x_ref, w1t_ref, w2t_ref, o_ref, *, channels_on_lanes):
    # channels_on_lanes=False: x_ref is (TB, C, HW)   (HW on lanes)
    # channels_on_lanes=True:  x_ref is (TB, HW, C)   (C on lanes)
    # w1t_ref: (C, C//r)  fc1 weight, pre-transposed and pre-scaled by 1/HW
    # w2t_ref: (C//r, C)  fc2 weight, pre-transposed
    x = x_ref[...]                                           # native dtype

    # Squeeze: global sum pool (1/HW is folded into w1t), f32 accumulate.
    if channels_on_lanes:
        pooled = jnp.sum(x, axis=1, dtype=jnp.float32)       # (TB, C)
    else:
        pooled = jnp.sum(x, axis=2, dtype=jnp.float32)       # (TB, C)

    # Excitation: fc1 -> relu -> fc2 -> sigmoid (tiny MXU matmuls, f32 acc).
    h = jnp.dot(pooled, w1t_ref[...],
                preferred_element_type=jnp.float32)          # (TB, C//r)
    h = jnp.maximum(h, 0.0)
    s = jnp.dot(h, w2t_ref[...],
                preferred_element_type=jnp.float32)          # (TB, C)
    s = jax.nn.sigmoid(s).astype(x.dtype)

    # Scale: broadcast per-channel gate over the spatial dimension.
    if channels_on_lanes:
        o_ref[...] = (x * s[:, None, :]).astype(o_ref.dtype)
    else:
        o_ref[...] = (x * s[:, :, None]).astype(o_ref.dtype)


def _choose_tb(B, per_batch_bytes, budget_bytes):
    """Largest divisor of B whose double-buffered in+out tiles fit the budget,
    preferring choices that leave >= 2 grid steps (v7x megacore)."""
    divisors = [d for d in range(B, 0, -1) if B % d == 0]
    fitting = [d for d in divisors if 4 * d * per_batch_bytes <= budget_bytes]
    if not fitting:
        return 1
    multi = [d for d in fitting if B // d >= 2]
    return multi[0] if multi else fitting[0]


def se_block(x, w1, w2, *,
             tile_budget_bytes=24 * 1024 * 1024,
             vmem_limit_bytes=48 * 1024 * 1024):
    """x: (B, C, H, W) NCHW.  w1: (C//r, C), w2: (C, C//r) — PyTorch Linear layout."""
    B, C, H, W = x.shape
    HW = H * W
    hidden = w1.shape[0]

    # Fold the 1/HW mean factor into fc1's weights (exact: the pool is linear).
    w1t = (w1.T * (1.0 / HW)).astype(w1.dtype)   # (C, hidden)
    w2t = w2.T                                   # (hidden, C)

    # Lane-axis choice for unmasked, 128-dense stores.
    channels_on_lanes = (HW % 128 != 0) and (C % 128 == 0)

    if channels_on_lanes:
        x_flat = x.reshape(B, C, HW).transpose(0, 2, 1)      # (B, HW, C)
        block_shape = lambda tb: (tb, HW, C)
    else:
        x_flat = x.reshape(B, C, HW)                         # (B, C, HW)
        block_shape = lambda tb: (tb, C, HW)

    per_batch_bytes = C * HW * x.dtype.itemsize
    TB = _choose_tb(B, per_batch_bytes, tile_budget_bytes)
    grid = (B // TB,)

    kernel = functools.partial(_se_kernel, channels_on_lanes=channels_on_lanes)

    out_flat = pl.pallas_call(
        kernel,
        out_shape=jax.ShapeDtypeStruct(x_flat.shape, x.dtype),
        grid_spec=pltpu.PrefetchScalarGridSpec(
            num_scalar_prefetch=0,
            grid=grid,
            in_specs=[
                pl.BlockSpec(block_shape(TB), lambda b: (b, 0, 0)),
                pl.BlockSpec((C, hidden), lambda b: (0, 0)),
                pl.BlockSpec((hidden, C), lambda b: (0, 0)),
            ],
            out_specs=pl.BlockSpec(block_shape(TB), lambda b: (b, 0, 0)),
        ),
        compiler_params=pltpu.CompilerParams(
            dimension_semantics=("parallel",),
            vmem_limit_bytes=vmem_limit_bytes),
    )(x_flat, w1t, w2t)

    if channels_on_lanes:
        return out_flat.transpose(0, 2, 1).reshape(B, C, H, W)
    return out_flat.reshape(B, C, H, W)


def se_block_ref(x, w1, w2):
    """Pure-JAX reference matching the PyTorch forward."""
    y = jnp.mean(x, axis=(2, 3))                 # (B, C)
    y = jnp.maximum(y @ w1.T, 0.0)               # (B, C//r)
    y = jax.nn.sigmoid(y @ w2.T)                 # (B, C)
    return x * y[:, :, None, None]


def _run_case(key, B, C, H, W, r):
    hidden = max(C // r, 1)
    kx, k1, k2 = jax.random.split(key, 3)
    x = jax.random.normal(kx, (B, C, H, W), dtype=jnp.float32)
    w1 = jax.random.normal(k1, (hidden, C), dtype=jnp.float32) * (1.0 / C) ** 0.5
    w2 = jax.random.normal(k2, (C, hidden), dtype=jnp.float32) * (1.0 / hidden) ** 0.5

    out = jax.block_until_ready(se_block(x, w1, w2))
    ref = se_block_ref(x, w1, w2)
    assert out.shape == (B, C, H, W)
    assert jnp.allclose(out, ref, atol=1e-5, rtol=1e-5), \
        f"mismatch vs reference for shape {(B, C, H, W)}"


if __name__ == "__main__":
    key = jax.random.PRNGKey(0)
    k_a, k_b = jax.random.split(key)

    # Case 1: HW is a multiple of 128 -> (B, C, HW) layout (HW on lanes).
    _run_case(k_a, B=2, C=32, H=16, W=16, r=16)

    # Case 2: HW=49 not a multiple of 128, C=128 -> (B, HW, C) layout (C on lanes).
    _run_case(k_b, B=2, C=128, H=7, W=7, r=16)

    print("KERNEL_OK")
</pallas_src>

<mosaic_0001>
module attributes {stable_mosaic.version = 11 : i64} {
  func.func @_se_kernel(%arg0: i32, %arg1: memref<1x32x256xf32, #tpu.memory_space<vmem>>, %arg2: memref<32x2xf32, #tpu.memory_space<vmem>>, %arg3: memref<2x32xf32, #tpu.memory_space<vmem>>, %arg4: memref<1x32x256xf32, #tpu.memory_space<vmem>>) attributes {dimension_semantics = [#tpu.dimension_semantics<parallel>], iteration_bounds = array<i64: 2>, scalar_prefetch = 0 : i64, scratch_operands = 0 : i64, tpu.core_type = #tpu.core_type<tc>, window_params = [{transform_indices = @transform_0, window_bounds = array<i64: 1, 32, 256>}, {pipeline_mode = #tpu.pipeline_mode<synchronous>, transform_indices = @transform_1, window_bounds = array<i64: 32, 2>}, {pipeline_mode = #tpu.pipeline_mode<synchronous>, transform_indices = @transform_2, window_bounds = array<i64: 2, 32>}, {transform_indices = @transform_3, window_bounds = array<i64: 1, 32, 256>}]} {
    %c0 = arith.constant 0 : index
    %c0_0 = arith.constant 0 : index
    %c0_1 = arith.constant 0 : index
    %0 = vector.load %arg1[%c0, %c0_0, %c0_1] : memref<1x32x256xf32, #tpu.memory_space<vmem>>, vector<1x32x256xf32>
    %cst = arith.constant dense<0.000000e+00> : vector<1x32xf32>
    %1 = vector.multi_reduction <add>, %0, %cst [2] : vector<1x32x256xf32> to vector<1x32xf32>
    %c0_2 = arith.constant 0 : index
    %c0_3 = arith.constant 0 : index
    %2 = vector.load %arg2[%c0_2, %c0_3] : memref<32x2xf32, #tpu.memory_space<vmem>>, vector<32x2xf32>
    %cst_4 = arith.constant dense<0.000000e+00> : vector<1x2xf32>
    %3 = tpu.matmul %1, %2, %cst_4 {dimension_numbers = #tpu.dot_dimension_numbers<[1], [0], [0], [1], [0, 0, 1, 1], [], []>} : vector<1x32xf32>, vector<32x2xf32>, vector<1x2xf32> -> vector<1x2xf32>
    %cst_5 = arith.constant 0.000000e+00 : f32
    %4 = vector.broadcast %cst_5 : f32 to vector<1x2xf32>
    %5 = arith.maximumf %3, %4 : vector<1x2xf32>
    %c0_6 = arith.constant 0 : index
    %c0_7 = arith.constant 0 : index
    %6 = vector.load %arg3[%c0_6, %c0_7] : memref<2x32xf32, #tpu.memory_space<vmem>>, vector<2x32xf32>
    %cst_8 = arith.constant dense<0.000000e+00> : vector<1x32xf32>
    %7 = tpu.matmul %5, %6, %cst_8 {dimension_numbers = #tpu.dot_dimension_numbers<[1], [0], [0], [1], [0, 0, 1, 1], [], []>} : vector<1x2xf32>, vector<2x32xf32>, vector<1x32xf32> -> vector<1x32xf32>
    %8 = arith.negf %7 : vector<1x32xf32>
    %9 = math.exp %8 : vector<1x32xf32>
    %cst_9 = arith.constant 1.000000e+00 : f32
    %10 = vector.broadcast %cst_9 : f32 to vector<1x32xf32>
    %11 = arith.addf %10, %9 : vector<1x32xf32>
    %12 = arith.divf %10, %11 : vector<1x32xf32>
    %13 = vector.shape_cast %12 : vector<1x32xf32> to vector<1x32x1xf32>
    %14 = vector.broadcast %13 : vector<1x32x1xf32> to vector<1x32x256xf32>
    %15 = arith.mulf %0, %14 : vector<1x32x256xf32>
    %c0_10 = arith.constant 0 : index
    %c0_11 = arith.constant 0 : index
    %c0_12 = arith.constant 0 : index
    %16 = vector.load %arg4[%c0_10, %c0_11, %c0_12] : memref<1x32x256xf32, #tpu.memory_space<vmem>>, vector<1x32x256xf32>
    tpu.vector_store %arg4[%c0_10, %c0_11, %c0_12], %15 {strides = array<i32>} : memref<1x32x256xf32, #tpu.memory_space<vmem>>, vector<1x32x256xf32>,
    return
  }
  func.func @transform_0(%arg0: i32) -> (i32, i32, i32) {
    %c0_i32 = arith.constant 0 : i32
    %c0_i32_0 = arith.constant 0 : i32
    %c0_i32_1 = arith.constant 0 : i32
    return %arg0, %c0_i32, %c0_i32_0 : i32, i32, i32
  }
  func.func @transform_1(%arg0: i32) -> (i32, i32) {
    %c0_i32 = arith.constant 0 : i32
    %c0_i32_0 = arith.constant 0 : i32
    %c0_i32_1 = arith.constant 0 : i32
    return %c0_i32, %c0_i32_0 : i32, i32
  }
  func.func @transform_2(%arg0: i32) -> (i32, i32) {
    %c0_i32 = arith.constant 0 : i32
    %c0_i32_0 = arith.constant 0 : i32
    %c0_i32_1 = arith.constant 0 : i32
    return %c0_i32, %c0_i32_0 : i32, i32
  }
  func.func @transform_3(%arg0: i32) -> (i32, i32, i32) {
    %c0_i32 = arith.constant 0 : i32
    %c0_i32_0 = arith.constant 0 : i32
    %c0_i32_1 = arith.constant 0 : i32
    return %arg0, %c0_i32, %c0_i32_0 : i32, i32, i32
  }
}

</mosaic_0001>

<llo_original>
// kernel: tpu_custom_call.1
$region0: #{tpu_custom_call.1}
  #allocation0 [shape = 'u32[]', space=smem, size = 0x4, offset = 0x4, fixed_abs, tag = 'smem constant byte address 0x4 - core index']
  #allocation1 [shape = 'u32[72,128]{1,0:T(1,128)}', space=vmem, size = 0x9000, scoped, tag = 'internal scratch']
  %s0 = inlined_call_operand.hbm [shape: f32[2,32,256], index: 0, kind: input, shape index: {}]
  %s1 = inlined_call_operand.vmem [shape: f32[32,2], index: 1, kind: input, shape index: {}]
  %s2 = inlined_call_operand.vmem [shape: f32[2,32], index: 2, kind: input, shape index: {}]
  %s3 = inlined_call_operand.hbm [shape: f32[2,32,256], index: 3, kind: output, shape index: {}]
  %s4 = sld [smem:[#allocation0]]
  $region49: #{tpu_custom_call.1} parent=0
    _
  %s6 = ssub.s32 1, %s4
  %s7 = scalar_select 0, %s6, %s4
  $region1: #{tpu_custom_call.1} parent=0
    #allocation2 [shape = 'u8[65536]{0}', space=vmem, size = 0x10000, scoped, tag = 'input window, operand 0']
    #allocation3 [shape = 's32[2]{0}', space=sflag, size = 0x8, scoped, tag = 'scoped memory for tpu_custom_call.1']
    #allocation4 [shape = 's32[2]{0}', space=sflag, size = 0x8, scoped, tag = 'scoped memory for tpu_custom_call.1']
    #allocation5 [shape = 'u8[65536]{0}', space=vmem, size = 0x10000, scoped, tag = 'output window, operand 0']
    %8 = vsyncpa [#allocation3], 0
    %s9 = scalar_lea.sflag [#allocation3], 1
    %10 = vsyncpa %s9, 0
    %11 = vsyncpa [#allocation4], 0
    %s12 = scalar_lea.sflag [#allocation4], 1
    %13 = vsyncpa %s12, 0
    loop: start=0, step=1, limit=4
    $region2: #{tpu_custom_call.1} parent=1 // loop_pre_header
      _
    $region3: #{tpu_custom_call.1} parent=1 // loop_header
      %s15 = sphi 0, %s19
      %p16 = scmp.ge.s32.totalorder %s15, 4
      %s25 = sphi 0, %s27
      %s28 = sphi 0, %s25
      %s29 = sphi 0, %s28
      %s45 = sphi 0, %s29
      %s49 = sphi 0, %s49
      %s51 = sphi 0, %s49
      %s52 = sphi 0, %s51
      %s66 = sphi 0, %s52
      %s70 = sphi 0, %s70
      %s72 = sphi 0, %s70
      %s73 = sphi 0, %s72
      %s87 = sphi 0, %s73
      %s93 = sphi 0, %s95
      %s96 = sphi 0, %s93
      %s97 = sphi 0, %s96
      %s113 = sphi 0, %s97
    $region4: #{tpu_custom_call.1} parent=1 // loop_header_branch
      %18 = sbr.rel (%p16) target = $region8
    $region5: #{tpu_custom_call.1} parent=1 // loop_body
      %s20 = ssub.s32 %s15, 1
      %s21 = ssub.s32 %s15, 2
      %s22 = sadd.s32 %s15, 1
      %s23 = ssub.s32 %s15, %s22
      %p24 = scmp.eq.s32.totalorder %s23, 0
      %s26 = sadd.s32 %s25, 1
      %s27 = scalar_select %p24, %s25, %s26
      %p30 = pneg %p24
      %p31 = scmp.eq.s32.totalorder %s15, 1
      %p32 = por %p30, %p31
      %p33 = scmp.ne.s32.totalorder %s25, %s28
      %p34 = scmp.eq.s32.totalorder %s15, 0
      %p35 = por %p33, %p34
      %p36 = scmp.ne.s32.totalorder %s25, %s28
      %p37 = scmp.eq.s32.totalorder %s20, 1
      %p38 = por %p36, %p37
      %p39 = scmp.ne.s32.totalorder %s28, %s29
      %p40 = scmp.eq.s32.totalorder %s20, 0
      %p41 = por %p39, %p40
      %p42 = scmp.ne.s32.totalorder %s28, %s29
      %p43 = scmp.eq.s32.totalorder %s21, 1
      %p44 = por %p42, %p43
      %p46 = scmp.ne.s32.totalorder %s29, %s45
      %p47 = scmp.eq.s32.totalorder %s21, 0
      %p48 = por %p46, %p47
      %s50 = sadd.s32 %s49, 1
      %p53 = scmp.eq.s32.totalorder %s15, 1
      %p54 = scmp.ne.s32.totalorder %s49, %s51
      %p55 = scmp.eq.s32.totalorder %s15, 0
      %p56 = por %p54, %p55
      %p57 = scmp.ne.s32.totalorder %s49, %s51
      %p58 = scmp.eq.s32.totalorder %s20, 1
      %p59 = por %p57, %p58
      %p60 = scmp.ne.s32.totalorder %s51, %s52
      %p61 = scmp.eq.s32.totalorder %s20, 0
      %p62 = por %p60, %p61
      %p63 = scmp.ne.s32.totalorder %s51, %s52
      %p64 = scmp.eq.s32.totalorder %s21, 1
      %p65 = por %p63, %p64
      %p67 = scmp.ne.s32.totalorder %s52, %s66
      %p68 = scmp.eq.s32.totalorder %s21, 0
      %p69 = por %p67, %p68
      %s71 = sadd.s32 %s70, 1
      %p74 = scmp.eq.s32.totalorder %s15, 1
      %p75 = scmp.ne.s32.totalorder %s70, %s72
      %p76 = scmp.eq.s32.totalorder %s15, 0
      %p77 = por %p75, %p76
      %p78 = scmp.ne.s32.totalorder %s70, %s72
      %p79 = scmp.eq.s32.totalorder %s20, 1
      %p80 = por %p78, %p79
      %p81 = scmp.ne.s32.totalorder %s72, %s73
      %p82 = scmp.eq.s32.totalorder %s20, 0
      %p83 = por %p81, %p82
      %p84 = scmp.ne.s32.totalorder %s72, %s73
      %p85 = scmp.eq.s32.totalorder %s21, 1
      %p86 = por %p84, %p85
      %p88 = scmp.ne.s32.totalorder %s73, %s87
      %p89 = scmp.eq.s32.totalorder %s21, 0
      %p90 = por %p88, %p89
      %s91 = ssub.s32 %s15, %s22
      %p92 = scmp.eq.s32.totalorder %s91, 0
      %s94 = sadd.s32 %s93, 1
      %s95 = scalar_select %p92, %s93, %s94
      %p98 = pneg %p92
      %p99 = scmp.eq.s32.totalorder %s15, 1
      %p100 = por %p98, %p99
      %p101 = scmp.ne.s32.totalorder %s93, %s96
      %p102 = scmp.eq.s32.totalorder %s15, 0
      %p103 = por %p101, %p102
      %p104 = scmp.ne.s32.totalorder %s93, %s96
      %p105 = scmp.eq.s32.totalorder %s20, 1
      %p106 = por %p104, %p105
      %p107 = scmp.ne.s32.totalorder %s96, %s97
      %p108 = scmp.eq.s32.totalorder %s20, 0
      %p109 = por %p107, %p108
      %p110 = scmp.ne.s32.totalorder %s96, %s97
      %p111 = scmp.eq.s32.totalorder %s21, 1
      %p112 = por %p110, %p111
      %p114 = scmp.ne.s32.totalorder %s97, %s113
      %p115 = scmp.eq.s32.totalorder %s21, 0
      %p116 = por %p114, %p115
      %p117 = scmp.le.s32.totalorder 1, %s15
      %p118 = scmp.lt.s32.totalorder %s15, 3
      %p119 = pnand %p117, %p118
      %p120 = pneg %p119
      // Predicated region
      $region9: #{tpu_custom_call.1} parent=5 // pred_check
        _
      $region10: #{tpu_custom_call.1} parent=5 // pred_check_branch
        %122 = sbr.rel (%p119) target = $region12
      $region11: #{tpu_custom_call.1} parent=5 // pred_region
        %s123 = ssub.s32 %s15, 1
        // Predicated region
        $region13: #{tpu_custom_call.1} parent=11 // pred_check
          %p124 = pneg %p62
        $region14: #{tpu_custom_call.1} parent=11 // pred_check_branch
          %126 = sbr.rel (%p124) target = $region16
        $region15: #{tpu_custom_call.1} parent=11 // pred_region
          _
        $region16: #{tpu_custom_call.1} parent=11 // pred_fallthru
          _
        // Predicated region
        $region17: #{tpu_custom_call.1} parent=11 // pred_check
          %p127 = pneg %p83
        $region18: #{tpu_custom_call.1} parent=11 // pred_check_branch
          %129 = sbr.rel (%p127) target = $region20
        $region19: #{tpu_custom_call.1} parent=11 // pred_region
          _
        $region20: #{tpu_custom_call.1} parent=11 // pred_fallthru
          _
      $region12: #{tpu_custom_call.1} parent=5 // pred_fallthru
        _
      %p130 = scmp.lt.s32.totalorder %s15, 2
      // Predicated region
      $region21: #{tpu_custom_call.1} parent=5 // pred_check
        %p131 = pneg %p130
      $region22: #{tpu_custom_call.1} parent=5 // pred_check_branch
        %133 = sbr.rel (%p131) target = $region24
      $region23: #{tpu_custom_call.1} parent=5 // pred_region
        // Predicated region
        $region25: #{tpu_custom_call.1} parent=23 // pred_check
          %p134 = pneg %p35
        $region26: #{tpu_custom_call.1} parent=23 // pred_check_branch
          %136 = sbr.rel (%p134) target = $region28
        $region27: #{tpu_custom_call.1} parent=23 // pred_region
          %s137 = sand.u32 %s25, 1
          %s138 = scalar_lea.sflag [#allocation3], %s137
          %s139 = sand.u32 %s25, 1
          %s140 = smul.addr %s139, 64
          %s141 = scalar_lea.vmem [#allocation2], %s140
          %143 = vsyncadd %s138, 0
          %s144 = smul.addr %s15, 8
          %s145 = smul.addr %s144, 8
          %s146 = scalar_lea.hbm %s0, %s145
          %s147 = sshll.u32 %s146, 4
          %s148 = int_to_ptr.hbm [resolvable:$true] %s147
          %s149 = sshll.u32 %s141, 4
          %s150 = int_to_ptr.vmem [resolvable:$true] %s149
          %155 = dma.hbm_to_vmem [thread:$0]  %s148, 1024, %s150, %s138, 256, 256, 16
        $region28: #{tpu_custom_call.1} parent=23 // pred_fallthru
          _
      $region24: #{tpu_custom_call.1} parent=5 // pred_fallthru
        _
      %p156 = scmp.le.s32.totalorder 1, %s15
      %p157 = scmp.lt.s32.totalorder %s15, 3
      %p158 = pnand %p156, %p157
      %p159 = pneg %p158
      // Predicated region
      $region29: #{tpu_custom_call.1} parent=5 // pred_check
        _
      $region30: #{tpu_custom_call.1} parent=5 // pred_check_branch
        %161 = sbr.rel (%p158) target = $region32
      $region31: #{tpu_custom_call.1} parent=5 // pred_region
        %s162 = ssub.s32 %s15, 1
        %s163 = sand.u32 %s28, 1
        %s164 = scalar_lea.sflag [#allocation3], %s163
        %s165 = sand.u32 %s28, 1
        %s166 = smul.addr %s165, 64
        %s167 = scalar_lea.vmem [#allocation2], %s166
        // Predicated region
        $region33: #{tpu_custom_call.1} parent=31 // pred_check
          %p168 = pneg %p41
        $region34: #{tpu_custom_call.1} parent=31 // pred_check_branch
          %170 = sbr.rel (%p168) target = $region36
        $region35: #{tpu_custom_call.1} parent=31 // pred_region
          %172 = dma.done %s164, 1024
        $region36: #{tpu_custom_call.1} parent=31 // pred_fallthru
          _
        %s173 = sand.u32 %s28, 1
        %s174 = scalar_lea.sflag [#allocation3], %s173
        %s175 = sand.u32 %s28, 1
        %s176 = smul.addr %s175, 64
        %s177 = scalar_lea.vmem [#allocation2], %s176
        %p178 = pneg %p41
        %p179 = pneg %p38
        %p180 = pneg %p62
        %p181 = pneg %p59
        %p182 = pneg %p83
        %p183 = pneg %p80
        %p184 = pneg %p109
        %p185 = pneg %p106
        %s186 = sand.u32 %s96, 1
        %s187 = scalar_lea.sflag [#allocation4], %s186
        %s188 = sand.u32 %s96, 1
        %s189 = smul.addr %s188, 64
        %s190 = scalar_lea.vmem [#allocation5], %s189
        %v191 = vld [vmem:[%s167] sm:$0xff]
        %v192 = vld [vmem:[%s167 + $0x8] sm:$0xff]
        %v193 = vld [vmem:[%s167 + $0x10] sm:$0xff]
        %v194 = vld [vmem:[%s167 + $0x18] sm:$0xff]
        %v195 = vld [vmem:[%s167 + $0x20] sm:$0xff]
        %v196 = vld [vmem:[%s167 + $0x28] sm:$0xff]
        %v197 = vld [vmem:[%s167 + $0x30] sm:$0xff]
        %v198 = vld [vmem:[%s167 + $0x38] sm:$0xff]
        %v199 = vadd.f32 %v191, %v192
        %200 = vadd.xlane.f32.xlu0 %v199
        %v201 = vpop.xlane.xlu0 %200
        %v202 = vadd.f32 %v193, %v194
        %203 = vadd.xlane.f32.xlu0 %v202
        %v204 = vpop.xlane.xlu0 %203
        %v205 = vadd.f32 %v195, %v196
        %206 = vadd.xlane.f32.xlu0 %v205
        %v207 = vpop.xlane.xlu0 %206
        %v208 = vadd.f32 %v197, %v198
        %209 = vadd.xlane.f32.xlu0 %v208
        %v210 = vpop.xlane.xlu0 %209
        %v211 = vld [vmem:[%s1] sm:$0xff]
        %v212 = vld [vmem:[%s1 + $0x8] sm:$0xff]
        %v213 = vld [vmem:[%s1 + $0x10] sm:$0xff]
        %v214 = vld [vmem:[%s1 + $0x18] sm:$0xff]
        %v219 = vlaneseq
        %v220 = vand.u32 %v219, 127
        %v221 = vperm.slane %v201, %v220
        %v222 = vadd.s32 %v220, 4294967288
        %v223 = vperm.slane %v204, %v222
        %vm224 = vcmask 130112
        %v225 = vsel %vm224, %v223, %v221
        %v226 = vadd.s32 %v220, 4294967280
        %v227 = vperm.slane %v207, %v226
        %vm228 = vcmask 195712
        %v229 = vsel %vm228, %v227, %v225
        %v230 = vadd.s32 %v220, 4294967272
        %v231 = vperm.slane %v210, %v230
        %vm232 = vcmask 261312
        %v233 = vsel %vm232, %v231, %v229
        %vm234 = vcmask 261120
        %v235 = vsel %vm234, %v233, 0
        %237 = vmatpush.msra.mxu0 0.0
        %238 = vmatpush.msra.mxu0 0.0
        %239 = vmatpush.msra.mxu0 0.0
        %240 = vmatpush.msra.mxu0 0.0
        %241 = vmatpush.msra.mxu0 0.0
        %242 = vmatpush.msra.mxu0 0.0
        %243 = vmatpush.msra.mxu0 0.0
        %244 = vmatpush.msra.mxu0 0.0
        %245 = vmatpush.msra.mxu0 0.0
        %246 = vmatpush.msra.mxu0 0.0
        %247 = vmatpush.msra.mxu0 0.0
        %248 = vmatpush.msra.mxu0 0.0
        %249 = vmatpush.msra.mxu0 %v214
        %250 = vmatpush.msra.mxu0 %v213
        %251 = vmatpush.msra.mxu0 %v212
        %252 = vmatpush.msra.mxu0 %v211
        %253 = vmatmul.f32.gmra.mxu0 %v235
        %v254 = vpop.f32.mrf.mxu0
        %v255 = vadd.f32 0.0, %v254
        %256 = vdwg.mxu0
        %v257 = vmax.f32 %v255, 0.0
        %v258 = vld [vmem:[%s2] sm:$0x3]
        %vm259 = vcmask 15360
        %v261 = vsel %vm259, %v257, 0
        %vm263 = vcmask 1041408
        %v265 = vsel %vm263, %v258, 0
        %267 = vmatpush.msra.mxu0 0.0
        %268 = vmatpush.msra.mxu0 0.0
        %269 = vmatpush.msra.mxu0 0.0
        %270 = vmatpush.msra.mxu0 0.0
        %271 = vmatpush.msra.mxu0 0.0
        %272 = vmatpush.msra.mxu0 0.0
        %273 = vmatpush.msra.mxu0 0.0
        %274 = vmatpush.msra.mxu0 0.0
        %275 = vmatpush.msra.mxu0 0.0
        %276 = vmatpush.msra.mxu0 0.0
        %277 = vmatpush.msra.mxu0 0.0
        %278 = vmatpush.msra.mxu0 0.0
        %279 = vmatpush.msra.mxu0 0.0
        %280 = vmatpush.msra.mxu0 0.0
        %281 = vmatpush.msra.mxu0 0.0
        %282 = vmatpush.msra.mxu0 %v265
        %283 = vmatmul.f32.gmra.mxu0 %v261
        %v284 = vpop.f32.mrf.mxu0
        %v285 = vadd.f32 0.0, %v284
        %286 = vdwg.mxu0
        %v287 = vxor.u32 %v285, 2147483648
        %v288 = vmul.f32 %v287, 1.442695
        %v289 = vpow.pop %v288
        %v290 = vadd.f32 %v289, 1.0
        %v291 = vrcp.pop %v290
        %v292 = vmul.f32 %v290, %v291
        %v293 = vsub.f32 1.0, %v292
        %v294 = vmul.f32 %v291, %v293
        %v295 = vadd.f32 %v291, %v294
        %vm296 = vweird.f32 %v290
        %vm297 = vweird.f32 %v291
        %vm298 = vmor %vm296, %vm297
        %v299 = vsel %vm298, %v291, %v295
        %v300 = vand.u32 2147483647, %v290
        %vm301 = vcmp.eq.f32.partialorder %v300, 8.507059e+37
        %v302 = vand.u32 %v290, 2147483648
        %v303 = vor.u32 1.1754944e-38, %v302
        %v304 = vsel %vm301, %v303, %v299
        %v305 = vmul.f32 1.0, %v304
        %v306 = vperm.slane %v305, 0
        %v307 = vlaneseq
        %v308 = vshrl.u32 %v307, 7
        %310 = vset.pattern.permute.xlu0 %v308
        %311 = vperm.xlu0 %310, %v306
        %v312 = vpop.permute.xlu0 %311
        %v313 = vlaneseq
        %v314 = vshrl.u32 %v313, 7
        %v315 = vadd.s32 %v314, 8
        %316 = vset.pattern.permute.xlu0 %v315
        %317 = vperm.xlu0 %316, %v306
        %v318 = vpop.permute.xlu0 %317
        %v319 = vlaneseq
        %v320 = vshrl.u32 %v319, 7
        %v321 = vadd.s32 %v320, 16
        %322 = vset.pattern.permute.xlu0 %v321
        %323 = vperm.xlu0 %322, %v306
        %v324 = vpop.permute.xlu0 %323
        %v325 = vlaneseq
        %v326 = vshrl.u32 %v325, 7
        %v327 = vadd.s32 %v326, 24
        %328 = vset.pattern.permute.xlu0 %v327
        %329 = vperm.xlu0 %328, %v306
        %v330 = vpop.permute.xlu0 %329
        %v331 = vmul.f32 %v191, %v312
        %v332 = vmul.f32 %v192, %v312
        %v333 = vmul.f32 %v193, %v318
        %v334 = vmul.f32 %v194, %v318
        %v335 = vmul.f32 %v195, %v324
        %v336 = vmul.f32 %v196, %v324
        %v337 = vmul.f32 %v197, %v330
        %v338 = vmul.f32 %v198, %v330
        %339 = vst [vmem:[%s190] sm:$0xff] %v331
        %340 = vst [vmem:[%s190 + $0x8] sm:$0xff] %v332
        %341 = vst [vmem:[%s190 + $0x10] sm:$0xff] %v333
        %342 = vst [vmem:[%s190 + $0x18] sm:$0xff] %v334
        %343 = vst [vmem:[%s190 + $0x20] sm:$0xff] %v335
        %344 = vst [vmem:[%s190 + $0x28] sm:$0xff] %v336
        %345 = vst [vmem:[%s190 + $0x30] sm:$0xff] %v337
        %346 = vst [vmem:[%s190 + $0x38] sm:$0xff] %v338
        %s347 = sand.u32 %s96, 1
        %s348 = scalar_lea.sflag [#allocation4], %s347
        %s349 = sand.u32 %s96, 1
        %s350 = smul.addr %s349, 64
        %s351 = scalar_lea.vmem [#allocation5], %s350
        // Predicated region
        $region37: #{tpu_custom_call.1} parent=31 // pred_check
          %p352 = pneg %p106
        $region38: #{tpu_custom_call.1} parent=31 // pred_check_branch
          %354 = sbr.rel (%p352) target = $region40
        $region39: #{tpu_custom_call.1} parent=31 // pred_region
          %356 = vsyncadd %s348, 0
          %s357 = smul.addr %s20, 8
          %s358 = smul.addr %s357, 8
          %s359 = scalar_lea.hbm %s3, %s358
          %s360 = sshll.u32 %s351, 4
          %s361 = int_to_ptr.vmem [resolvable:$true] %s360
          %s362 = sshll.u32 %s359, 4
          %s363 = int_to_ptr.hbm [resolvable:$true] %s362
          %368 = dma.vmem_to_hbm [thread:$0]  %s361, 1024, %s363, %s348, 256, 256, 16
        $region40: #{tpu_custom_call.1} parent=31 // pred_fallthru
          _
      $region32: #{tpu_custom_call.1} parent=5 // pred_fallthru
        _
      %p369 = scmp.le.s32.totalorder 2, %s15
      // Predicated region
      $region41: #{tpu_custom_call.1} parent=5 // pred_check
        %p370 = pneg %p369
      $region42: #{tpu_custom_call.1} parent=5 // pred_check_branch
        %372 = sbr.rel (%p370) target = $region44
      $region43: #{tpu_custom_call.1} parent=5 // pred_region
        %s373 = ssub.s32 %s15, 2
        // Predicated region
        $region45: #{tpu_custom_call.1} parent=43 // pred_check
          %p374 = pneg %p112
        $region46: #{tpu_custom_call.1} parent=43 // pred_check_branch
          %376 = sbr.rel (%p374) target = $region48
        $region47: #{tpu_custom_call.1} parent=43 // pred_region
          %s377 = sand.u32 %s97, 1
          %s378 = scalar_lea.sflag [#allocation4], %s377
          %s379 = sand.u32 %s97, 1
          %s380 = smul.addr %s379, 64
          %s381 = scalar_lea.vmem [#allocation5], %s380
          %383 = dma.done %s378, 1024
        $region48: #{tpu_custom_call.1} parent=43 // pred_fallthru
          _
      $region44: #{tpu_custom_call.1} parent=5 // pred_fallthru
        _
    $region6: #{tpu_custom_call.1} parent=1 // loop_footer
      %s19 = sadd.s32 1, %s15
    $region7: #{tpu_custom_call.1} parent=1 // loop_footer_branch
      %14 = sbr.rel target = $region3
    $region8: #{tpu_custom_call.1} parent=1 // loop_exit
      _
    %384 = vsyncpa [#allocation3], 1
    %s385 = scalar_lea.sflag [#allocation3], 1
    %386 = vsyncpa %s385, 1
    %387 = vsyncpa [#allocation4], 1
    %s388 = scalar_lea.sflag [#allocation4], 1
    %389 = vsyncpa %s388, 1

</llo_original>
